<compile_context>
chip_gen: v6e
topology: v6e:2x2x1
jax: 0.10.0
libtpu: 0.0.40
codegen_flags: <defaults>
</compile_context>

<pallas_src>
import jax
import jax.numpy as jnp
from jax.experimental import pallas as pl
from jax.experimental.pallas import tpu as pltpu


def _mlp_kernel(xT_ref, w1t_ref, b1_ref, w2t_ref, b2_ref, w3t_ref, b3_ref, o_ref):
    # Feature-major: xT is (2, tile_n); all intermediates are (feat, tile_n) so the
    # lane axis (last dim, tile_n multiple of 128) is fully dense.
    xT = xT_ref[...]                                   # (2, tile_n)
    w1t = w1t_ref[...]                                 # (64, 2)

    # Layer 1: K=2 contraction -> two VPU FMAs (skip the MXU for a depth-2 dot).
    h1 = (w1t[:, 0:1] * xT[0:1, :]
          + w1t[:, 1:2] * xT[1:2, :]
          + b1_ref[...])                               # (64, tile_n)
    h1 = jnp.maximum(h1, 0.0)                          # ReLU

    # Layer 2: (64,64) @ (64,tile_n) on the MXU, f32 accumulation.
    h2 = jnp.dot(w2t_ref[...], h1,
                 preferred_element_type=jnp.float32) + b2_ref[...]
    h2 = jnp.maximum(h2, 0.0)                          # ReLU

    # Layer 3: (2,64) @ (64,tile_n).
    out = jnp.dot(w3t_ref[...], h2,
                  preferred_element_type=jnp.float32) + b3_ref[...]
    o_ref[...] = out.astype(o_ref.dtype)


def _round_up(a, b):
    return ((a + b - 1) // b) * b


def displacement_net_forward(x, params, *, max_tile_n=4096):
    """x: (N, 2) float32 batch of 2-D points.

    params: dict with torch-like orientation already transposed to (in, out):
      w1 (2, 64), b1 (64,), w2 (64, 64), b2 (64,), w3 (64, 2), b3 (2,).
    Returns (N, 2) float32, matching the PyTorch module's forward.
    """
    N = x.shape[0]
    assert x.shape[1] == 2

    # Feature-major weights/biases (tiny; layout plumbing outside the kernel).
    w1t = params["w1"].T                  # (64, 2)
    b1 = params["b1"].reshape(-1, 1)      # (64, 1)
    w2t = params["w2"].T                  # (64, 64)
    b2 = params["b2"].reshape(-1, 1)      # (64, 1)
    w3t = params["w3"].T                  # (2, 64)
    b3 = params["b3"].reshape(-1, 1)      # (2, 1)

    # ---- tile selection: lane-dense (multiple of 128), big, and >=2 grid steps
    # when the batch allows it (v7x shards the "parallel" axis over 2 TCs).
    max_tile_n = max(128, (max_tile_n // 128) * 128)
    n_pad = _round_up(N, 128)
    if n_pad >= 256:
        tile_n = min(max_tile_n, (n_pad // 2) // 128 * 128)
    else:
        tile_n = 128
    n_pad = _round_up(n_pad, tile_n)
    grid = (n_pad // tile_n,)

    # ---- VMEM budget: double-buffered x/out tiles (sublane-padded to 8 rows)
    # plus the two (64, tile_n) f32 intermediates, with 2x headroom.
    io_bytes = 2 * 2 * (8 * tile_n * 4)        # x + out, 2 buffers each
    inter_bytes = 2 * 64 * tile_n * 4          # h1, h2
    vmem_limit = min(64 << 20, max(16 << 20, 2 * (io_bytes + inter_bytes) + (2 << 20)))

    # Pad batch (zero rows are harmless: they are sliced off below) and transpose
    # to feature-major so the kernel's last dim is the dense batch axis.
    xT = jnp.zeros((2, n_pad), x.dtype).at[:, :N].set(x.T)

    def whole(shape):
        return pl.BlockSpec(shape, lambda i: (0,) * len(shape))

    # TODO(synk): for tiny batches (N < ~512) plain XLA fusion beats the fixed
    # pallas_call launch/pipeline overhead; a caller-side bypass could be added.
    out_t = pl.pallas_call(
        _mlp_kernel,
        out_shape=jax.ShapeDtypeStruct((2, n_pad), jnp.float32),
        grid_spec=pltpu.PrefetchScalarGridSpec(
            num_scalar_prefetch=0,
            grid=grid,
            in_specs=[
                pl.BlockSpec((2, tile_n), lambda i: (0, i)),   # x tile (lane-dense)
                whole(w1t.shape), whole(b1.shape),
                whole(w2t.shape), whole(b2.shape),
                whole(w3t.shape), whole(b3.shape),
            ],
            out_specs=pl.BlockSpec((2, tile_n), lambda i: (0, i)),
        ),
        compiler_params=pltpu.CompilerParams(
            dimension_semantics=("parallel",),
            vmem_limit_bytes=vmem_limit,
        ),
    )(xT, w1t, b1, w2t, b2, w3t, b3)

    return out_t.T[:N]


def init_params(key):
    """Shapes matching nn.Sequential(Linear(2,64), ReLU, Linear(64,64), ReLU,
    Linear(64,2)); weights stored (in, out), biases (out,)."""
    k1, k2, k3, k4, k5, k6 = jax.random.split(key, 6)

    def lin(kw, kb, fan_in, fan_out):
        bound = 1.0 / jnp.sqrt(fan_in)
        w = jax.random.uniform(kw, (fan_in, fan_out), jnp.float32, -bound, bound)
        b = jax.random.uniform(kb, (fan_out,), jnp.float32, -bound, bound)
        return w, b

    w1, b1 = lin(k1, k2, 2, 64)
    w2, b2 = lin(k3, k4, 64, 64)
    w3, b3 = lin(k5, k6, 64, 2)
    return {"w1": w1, "b1": b1, "w2": w2, "b2": b2, "w3": w3, "b3": b3}


def reference_forward(x, p):
    h1 = jnp.maximum(x @ p["w1"] + p["b1"], 0.0)
    h2 = jnp.maximum(h1 @ p["w2"] + p["b2"], 0.0)
    return h2 @ p["w3"] + p["b3"]


if __name__ == "__main__":
    key = jax.random.PRNGKey(0)
    kx, kp = jax.random.split(key)

    # Small, ragged batch of 2-D displacement points (exercises the padding path
    # and a 2-step parallel grid).
    N = 1000
    x = jax.random.normal(kx, (N, 2), jnp.float32)
    params = init_params(kp)

    out = displacement_net_forward(x, params)
    out = jax.block_until_ready(out)

    ref = reference_forward(x, params)
    assert out.shape == (N, 2)
    assert jnp.allclose(out, ref, atol=1e-4, rtol=1e-4), "mismatch vs reference"

    print("KERNEL_OK")
</pallas_src>

<mosaic_0001>
module attributes {stable_mosaic.version = 11 : i64} {
  func.func @_mlp_kernel(%arg0: i32, %arg1: memref<2x512xf32, #tpu.memory_space<vmem>>, %arg2: memref<64x2xf32, #tpu.memory_space<vmem>>, %arg3: memref<64x1xf32, #tpu.memory_space<vmem>>, %arg4: memref<64x64xf32, #tpu.memory_space<vmem>>, %arg5: memref<64x1xf32, #tpu.memory_space<vmem>>, %arg6: memref<2x64xf32, #tpu.memory_space<vmem>>, %arg7: memref<2x1xf32, #tpu.memory_space<vmem>>, %arg8: memref<2x512xf32, #tpu.memory_space<vmem>>) attributes {dimension_semantics = [#tpu.dimension_semantics<parallel>], iteration_bounds = array<i64: 2>, scalar_prefetch = 0 : i64, scratch_operands = 0 : i64, tpu.core_type = #tpu.core_type<tc>, window_params = [{transform_indices = @transform_0, window_bounds = array<i64: 2, 512>}, {pipeline_mode = #tpu.pipeline_mode<synchronous>, transform_indices = @transform_1, window_bounds = array<i64: 64, 2>}, {pipeline_mode = #tpu.pipeline_mode<synchronous>, transform_indices = @transform_2, window_bounds = array<i64: 64, 1>}, {pipeline_mode = #tpu.pipeline_mode<synchronous>, transform_indices = @transform_3, window_bounds = array<i64: 64, 64>}, {pipeline_mode = #tpu.pipeline_mode<synchronous>, transform_indices = @transform_4, window_bounds = array<i64: 64, 1>}, {pipeline_mode = #tpu.pipeline_mode<synchronous>, transform_indices = @transform_5, window_bounds = array<i64: 2, 64>}, {pipeline_mode = #tpu.pipeline_mode<synchronous>, transform_indices = @transform_6, window_bounds = array<i64: 2, 1>}, {transform_indices = @transform_7, window_bounds = array<i64: 2, 512>}]} {
    %c0 = arith.constant 0 : index
    %c0_0 = arith.constant 0 : index
    %0 = vector.load %arg1[%c0, %c0_0] : memref<2x512xf32, #tpu.memory_space<vmem>>, vector<2x512xf32>
    %c0_1 = arith.constant 0 : index
    %c0_2 = arith.constant 0 : index
    %1 = vector.load %arg2[%c0_1, %c0_2] : memref<64x2xf32, #tpu.memory_space<vmem>>, vector<64x2xf32>
    %2 = vector.extract_strided_slice %1 {offsets = [0, 0], sizes = [64, 1], strides = [1, 1]} : vector<64x2xf32> to vector<64x1xf32>
    %3 = vector.extract_strided_slice %0 {offsets = [0, 0], sizes = [1, 512], strides = [1, 1]} : vector<2x512xf32> to vector<1x512xf32>
    %4 = vector.broadcast %2 : vector<64x1xf32> to vector<64x512xf32>
    %5 = vector.broadcast %3 : vector<1x512xf32> to vector<64x512xf32>
    %6 = arith.mulf %4, %5 : vector<64x512xf32>
    %7 = vector.extract_strided_slice %1 {offsets = [0, 1], sizes = [64, 1], strides = [1, 1]} : vector<64x2xf32> to vector<64x1xf32>
    %8 = vector.extract_strided_slice %0 {offsets = [1, 0], sizes = [1, 512], strides = [1, 1]} : vector<2x512xf32> to vector<1x512xf32>
    %9 = vector.broadcast %7 : vector<64x1xf32> to vector<64x512xf32>
    %10 = vector.broadcast %8 : vector<1x512xf32> to vector<64x512xf32>
    %11 = arith.mulf %9, %10 : vector<64x512xf32>
    %12 = arith.addf %6, %11 : vector<64x512xf32>
    %c0_3 = arith.constant 0 : index
    %c0_4 = arith.constant 0 : index
    %13 = vector.load %arg3[%c0_3, %c0_4] : memref<64x1xf32, #tpu.memory_space<vmem>>, vector<64x1xf32>
    %14 = vector.broadcast %13 : vector<64x1xf32> to vector<64x512xf32>
    %15 = arith.addf %12, %14 : vector<64x512xf32>
    %cst = arith.constant 0.000000e+00 : f32
    %16 = vector.broadcast %cst : f32 to vector<64x512xf32>
    %17 = arith.maximumf %15, %16 : vector<64x512xf32>
    %c0_5 = arith.constant 0 : index
    %c0_6 = arith.constant 0 : index
    %18 = vector.load %arg4[%c0_5, %c0_6] : memref<64x64xf32, #tpu.memory_space<vmem>>, vector<64x64xf32>
    %cst_7 = arith.constant dense<0.000000e+00> : vector<64x512xf32>
    %19 = tpu.matmul %18, %17, %cst_7 {dimension_numbers = #tpu.dot_dimension_numbers<[1], [0], [0], [1], [0, 0, 1, 1], [], []>} : vector<64x64xf32>, vector<64x512xf32>, vector<64x512xf32> -> vector<64x512xf32>
    %c0_8 = arith.constant 0 : index
    %c0_9 = arith.constant 0 : index
    %20 = vector.load %arg5[%c0_8, %c0_9] : memref<64x1xf32, #tpu.memory_space<vmem>>, vector<64x1xf32>
    %21 = vector.broadcast %20 : vector<64x1xf32> to vector<64x512xf32>
    %22 = arith.addf %19, %21 : vector<64x512xf32>
    %cst_10 = arith.constant 0.000000e+00 : f32
    %23 = vector.broadcast %cst_10 : f32 to vector<64x512xf32>
    %24 = arith.maximumf %22, %23 : vector<64x512xf32>
    %c0_11 = arith.constant 0 : index
    %c0_12 = arith.constant 0 : index
    %25 = vector.load %arg6[%c0_11, %c0_12] : memref<2x64xf32, #tpu.memory_space<vmem>>, vector<2x64xf32>
    %cst_13 = arith.constant dense<0.000000e+00> : vector<2x512xf32>
    %26 = tpu.matmul %25, %24, %cst_13 {dimension_numbers = #tpu.dot_dimension_numbers<[1], [0], [0], [1], [0, 0, 1, 1], [], []>} : vector<2x64xf32>, vector<64x512xf32>, vector<2x512xf32> -> vector<2x512xf32>
    %c0_14 = arith.constant 0 : index
    %c0_15 = arith.constant 0 : index
    %27 = vector.load %arg7[%c0_14, %c0_15] : memref<2x1xf32, #tpu.memory_space<vmem>>, vector<2x1xf32>
    %28 = vector.broadcast %27 : vector<2x1xf32> to vector<2x512xf32>
    %29 = arith.addf %26, %28 : vector<2x512xf32>
    %c0_16 = arith.constant 0 : index
    %c0_17 = arith.constant 0 : index
    %30 = vector.load %arg8[%c0_16, %c0_17] : memref<2x512xf32, #tpu.memory_space<vmem>>, vector<2x512xf32>
    tpu.vector_store %arg8[%c0_16, %c0_17], %29 {strides = array<i32>} : memref<2x512xf32, #tpu.memory_space<vmem>>, vector<2x512xf32>,
    return
  }
  func.func @transform_0(%arg0: i32) -> (i32, i32) {
    %c0_i32 = arith.constant 0 : i32
    %c0_i32_0 = arith.constant 0 : i32
    return %c0_i32, %arg0 : i32, i32
  }
  func.func @transform_1(%arg0: i32) -> (i32, i32) {
    %c0_i32 = arith.constant 0 : i32
    %c0_i32_0 = arith.constant 0 : i32
    %c0_i32_1 = arith.constant 0 : i32
    return %c0_i32, %c0_i32_0 : i32, i32
  }
  func.func @transform_2(%arg0: i32) -> (i32, i32) {
    %c0_i32 = arith.constant 0 : i32
    %c0_i32_0 = arith.constant 0 : i32
    %c0_i32_1 = arith.constant 0 : i32
    return %c0_i32, %c0_i32_0 : i32, i32
  }
  func.func @transform_3(%arg0: i32) -> (i32, i32) {
    %c0_i32 = arith.constant 0 : i32
    %c0_i32_0 = arith.constant 0 : i32
    %c0_i32_1 = arith.constant 0 : i32
    return %c0_i32, %c0_i32_0 : i32, i32
  }
  func.func @transform_4(%arg0: i32) -> (i32, i32) {
    %c0_i32 = arith.constant 0 : i32
    %c0_i32_0 = arith.constant 0 : i32
    %c0_i32_1 = arith.constant 0 : i32
    return %c0_i32, %c0_i32_0 : i32, i32
  }
  func.func @transform_5(%arg0: i32) -> (i32, i32) {
    %c0_i32 = arith.constant 0 : i32
    %c0_i32_0 = arith.constant 0 : i32
    %c0_i32_1 = arith.constant 0 : i32
    return %c0_i32, %c0_i32_0 : i32, i32
  }
  func.func @transform_6(%arg0: i32) -> (i32, i32) {
    %c0_i32 = arith.constant 0 : i32
    %c0_i32_0 = arith.constant 0 : i32
    %c0_i32_1 = arith.constant 0 : i32
    return %c0_i32, %c0_i32_0 : i32, i32
  }
  func.func @transform_7(%arg0: i32) -> (i32, i32) {
    %c0_i32 = arith.constant 0 : i32
    %c0_i32_0 = arith.constant 0 : i32
    return %c0_i32, %arg0 : i32, i32
  }
}

</mosaic_0001>

<llo_original>
// kernel: tpu_custom_call.1
$region0: #{tpu_custom_call.1}
  #allocation0 [shape = 'u32[]', space=smem, size = 0x4, offset = 0x4, fixed_abs, tag = 'smem constant byte address 0x4 - core index']
  #allocation1 [shape = 'u32[144,128]{1,0:T(1,128)}', space=vmem, size = 0x12000, scoped, tag = 'internal scratch']
  %s0 = inlined_call_operand.vmem [shape: f32[2,1024], index: 0, kind: input, shape index: {}]
  %s1 = inlined_call_operand.vmem [shape: f32[64,2], index: 1, kind: input, shape index: {}]
  %s2 = inlined_call_operand.vmem [shape: f32[64,1], index: 2, kind: input, shape index: {}]
  %s3 = inlined_call_operand.vmem [shape: f32[64,64], index: 3, kind: input, shape index: {}]
  %s4 = inlined_call_operand.vmem [shape: f32[64,1], index: 4, kind: input, shape index: {}]
  %s5 = inlined_call_operand.vmem [shape: f32[2,64], index: 5, kind: input, shape index: {}]
  %s6 = inlined_call_operand.vmem [shape: f32[2,1], index: 6, kind: input, shape index: {}]
  %s7 = inlined_call_operand.hbm [shape: f32[2,1024], index: 7, kind: output, shape index: {}]
  %s8 = sld [smem:[#allocation0]]
  $region61: #{tpu_custom_call.1} parent=0
    _
  %s10 = ssub.s32 1, %s8
  %s11 = scalar_select 0, %s10, %s8
  $region1: #{tpu_custom_call.1} parent=0
    #allocation2 [shape = 'u8[8192]{0}', space=vmem, size = 0x2000, scoped, tag = 'output window, operand 0']
    #allocation3 [shape = 's32[2]{0}', space=sflag, size = 0x8, scoped, tag = 'scoped memory for tpu_custom_call.1']
    %12 = vsyncpa [#allocation3], 0
    %s13 = scalar_lea.sflag [#allocation3], 1
    %14 = vsyncpa %s13, 0
    loop: start=0, step=1, limit=4
    $region2: #{tpu_custom_call.1} parent=1 // loop_pre_header
      _
    $region3: #{tpu_custom_call.1} parent=1 // loop_header
      %s16 = sphi 0, %s20
      %p17 = scmp.ge.s32.totalorder %s16, 4
      %s26 = sphi 0, %s28
      %s29 = sphi 0, %s26
      %s30 = sphi 0, %s29
      %s46 = sphi 0, %s30
      %s50 = sphi 0, %s50
      %s52 = sphi 0, %s50
      %s53 = sphi 0, %s52
      %s67 = sphi 0, %s53
      %s71 = sphi 0, %s71
      %s73 = sphi 0, %s71
      %s74 = sphi 0, %s73
      %s88 = sphi 0, %s74
      %s92 = sphi 0, %s92
      %s94 = sphi 0, %s92
      %s95 = sphi 0, %s94
      %s109 = sphi 0, %s95
      %s113 = sphi 0, %s113
      %s115 = sphi 0, %s113
      %s116 = sphi 0, %s115
      %s130 = sphi 0, %s116
      %s134 = sphi 0, %s134
      %s136 = sphi 0, %s134
      %s137 = sphi 0, %s136
      %s151 = sphi 0, %s137
      %s155 = sphi 0, %s155
      %s157 = sphi 0, %s155
      %s158 = sphi 0, %s157
      %s172 = sphi 0, %s158
      %s178 = sphi 0, %s180
      %s181 = sphi 0, %s178
      %s182 = sphi 0, %s181
      %s198 = sphi 0, %s182
    $region4: #{tpu_custom_call.1} parent=1 // loop_header_branch
      %19 = sbr.rel (%p17) target = $region8
    $region5: #{tpu_custom_call.1} parent=1 // loop_body
      %s21 = ssub.s32 %s16, 1
      %s22 = ssub.s32 %s16, 2
      %s23 = sadd.s32 %s16, 1
      %s24 = ssub.s32 %s16, %s23
      %p25 = scmp.eq.s32.totalorder %s24, 0
      %s27 = sadd.s32 %s26, 1
      %s28 = scalar_select %p25, %s26, %s27
      %p31 = pneg %p25
      %p32 = scmp.eq.s32.totalorder %s16, 1
      %p33 = por %p31, %p32
      %p34 = scmp.ne.s32.totalorder %s26, %s29
      %p35 = scmp.eq.s32.totalorder %s16, 0
      %p36 = por %p34, %p35
      %p37 = scmp.ne.s32.totalorder %s26, %s29
      %p38 = scmp.eq.s32.totalorder %s21, 1
      %p39 = por %p37, %p38
      %p40 = scmp.ne.s32.totalorder %s29, %s30
      %p41 = scmp.eq.s32.totalorder %s21, 0
      %p42 = por %p40, %p41
      %p43 = scmp.ne.s32.totalorder %s29, %s30
      %p44 = scmp.eq.s32.totalorder %s22, 1
      %p45 = por %p43, %p44
      %p47 = scmp.ne.s32.totalorder %s30, %s46
      %p48 = scmp.eq.s32.totalorder %s22, 0
      %p49 = por %p47, %p48
      %s51 = sadd.s32 %s50, 1
      %p54 = scmp.eq.s32.totalorder %s16, 1
      %p55 = scmp.ne.s32.totalorder %s50, %s52
      %p56 = scmp.eq.s32.totalorder %s16, 0
      %p57 = por %p55, %p56
      %p58 = scmp.ne.s32.totalorder %s50, %s52
      %p59 = scmp.eq.s32.totalorder %s21, 1
      %p60 = por %p58, %p59
      %p61 = scmp.ne.s32.totalorder %s52, %s53
      %p62 = scmp.eq.s32.totalorder %s21, 0
      %p63 = por %p61, %p62
      %p64 = scmp.ne.s32.totalorder %s52, %s53
      %p65 = scmp.eq.s32.totalorder %s22, 1
      %p66 = por %p64, %p65
      %p68 = scmp.ne.s32.totalorder %s53, %s67
      %p69 = scmp.eq.s32.totalorder %s22, 0
      %p70 = por %p68, %p69
      %s72 = sadd.s32 %s71, 1
      %p75 = scmp.eq.s32.totalorder %s16, 1
      %p76 = scmp.ne.s32.totalorder %s71, %s73
      %p77 = scmp.eq.s32.totalorder %s16, 0
      %p78 = por %p76, %p77
      %p79 = scmp.ne.s32.totalorder %s71, %s73
      %p80 = scmp.eq.s32.totalorder %s21, 1
      %p81 = por %p79, %p80
      %p82 = scmp.ne.s32.totalorder %s73, %s74
      %p83 = scmp.eq.s32.totalorder %s21, 0
      %p84 = por %p82, %p83
      %p85 = scmp.ne.s32.totalorder %s73, %s74
      %p86 = scmp.eq.s32.totalorder %s22, 1
      %p87 = por %p85, %p86
      %p89 = scmp.ne.s32.totalorder %s74, %s88
      %p90 = scmp.eq.s32.totalorder %s22, 0
      %p91 = por %p89, %p90
      %s93 = sadd.s32 %s92, 1
      %p96 = scmp.eq.s32.totalorder %s16, 1
      %p97 = scmp.ne.s32.totalorder %s92, %s94
      %p98 = scmp.eq.s32.totalorder %s16, 0
      %p99 = por %p97, %p98
      %p100 = scmp.ne.s32.totalorder %s92, %s94
      %p101 = scmp.eq.s32.totalorder %s21, 1
      %p102 = por %p100, %p101
      %p103 = scmp.ne.s32.totalorder %s94, %s95
      %p104 = scmp.eq.s32.totalorder %s21, 0
      %p105 = por %p103, %p104
      %p106 = scmp.ne.s32.totalorder %s94, %s95
      %p107 = scmp.eq.s32.totalorder %s22, 1
      %p108 = por %p106, %p107
      %p110 = scmp.ne.s32.totalorder %s95, %s109
      %p111 = scmp.eq.s32.totalorder %s22, 0
      %p112 = por %p110, %p111
      %s114 = sadd.s32 %s113, 1
      %p117 = scmp.eq.s32.totalorder %s16, 1
      %p118 = scmp.ne.s32.totalorder %s113, %s115
      %p119 = scmp.eq.s32.totalorder %s16, 0
      %p120 = por %p118, %p119
      %p121 = scmp.ne.s32.totalorder %s113, %s115
      %p122 = scmp.eq.s32.totalorder %s21, 1
      %p123 = por %p121, %p122
      %p124 = scmp.ne.s32.totalorder %s115, %s116
      %p125 = scmp.eq.s32.totalorder %s21, 0
      %p126 = por %p124, %p125
      %p127 = scmp.ne.s32.totalorder %s115, %s116
      %p128 = scmp.eq.s32.totalorder %s22, 1
      %p129 = por %p127, %p128
      %p131 = scmp.ne.s32.totalorder %s116, %s130
      %p132 = scmp.eq.s32.totalorder %s22, 0
      %p133 = por %p131, %p132
      %s135 = sadd.s32 %s134, 1
      %p138 = scmp.eq.s32.totalorder %s16, 1
      %p139 = scmp.ne.s32.totalorder %s134, %s136
      %p140 = scmp.eq.s32.totalorder %s16, 0
      %p141 = por %p139, %p140
      %p142 = scmp.ne.s32.totalorder %s134, %s136
      %p143 = scmp.eq.s32.totalorder %s21, 1
      %p144 = por %p142, %p143
      %p145 = scmp.ne.s32.totalorder %s136, %s137
      %p146 = scmp.eq.s32.totalorder %s21, 0
      %p147 = por %p145, %p146
      %p148 = scmp.ne.s32.totalorder %s136, %s137
      %p149 = scmp.eq.s32.totalorder %s22, 1
      %p150 = por %p148, %p149
      %p152 = scmp.ne.s32.totalorder %s137, %s151
      %p153 = scmp.eq.s32.totalorder %s22, 0
      %p154 = por %p152, %p153
      %s156 = sadd.s32 %s155, 1
      %p159 = scmp.eq.s32.totalorder %s16, 1
      %p160 = scmp.ne.s32.totalorder %s155, %s157
      %p161 = scmp.eq.s32.totalorder %s16, 0
      %p162 = por %p160, %p161
      %p163 = scmp.ne.s32.totalorder %s155, %s157
      %p164 = scmp.eq.s32.totalorder %s21, 1
      %p165 = por %p163, %p164
      %p166 = scmp.ne.s32.totalorder %s157, %s158
      %p167 = scmp.eq.s32.totalorder %s21, 0
      %p168 = por %p166, %p167
      %p169 = scmp.ne.s32.totalorder %s157, %s158
      %p170 = scmp.eq.s32.totalorder %s22, 1
      %p171 = por %p169, %p170
      %p173 = scmp.ne.s32.totalorder %s158, %s172
      %p174 = scmp.eq.s32.totalorder %s22, 0
      %p175 = por %p173, %p174
      %s176 = ssub.s32 %s16, %s23
      %p177 = scmp.eq.s32.totalorder %s176, 0
      %s179 = sadd.s32 %s178, 1
      %s180 = scalar_select %p177, %s178, %s179
      %p183 = pneg %p177
      %p184 = scmp.eq.s32.totalorder %s16, 1
      %p185 = por %p183, %p184
      %p186 = scmp.ne.s32.totalorder %s178, %s181
      %p187 = scmp.eq.s32.totalorder %s16, 0
      %p188 = por %p186, %p187
      %p189 = scmp.ne.s32.totalorder %s178, %s181
      %p190 = scmp.eq.s32.totalorder %s21, 1
      %p191 = por %p189, %p190
      %p192 = scmp.ne.s32.totalorder %s181, %s182
      %p193 = scmp.eq.s32.totalorder %s21, 0
      %p194 = por %p192, %p193
      %p195 = scmp.ne.s32.totalorder %s181, %s182
      %p196 = scmp.eq.s32.totalorder %s22, 1
      %p197 = por %p195, %p196
      %p199 = scmp.ne.s32.totalorder %s182, %s198
      %p200 = scmp.eq.s32.totalorder %s22, 0
      %p201 = por %p199, %p200
      %p202 = scmp.le.s32.totalorder 1, %s16
      %p203 = scmp.lt.s32.totalorder %s16, 3
      %p204 = pnand %p202, %p203
      %p205 = pneg %p204
      // Predicated region
      $region9: #{tpu_custom_call.1} parent=5 // pred_check
        _
      $region10: #{tpu_custom_call.1} parent=5 // pred_check_branch
        %207 = sbr.rel (%p204) target = $region12
      $region11: #{tpu_custom_call.1} parent=5 // pred_region
        %s208 = ssub.s32 %s16, 1
        // Predicated region
        $region13: #{tpu_custom_call.1} parent=11 // pred_check
          %p209 = pneg %p63
        $region14: #{tpu_custom_call.1} parent=11 // pred_check_branch
          %211 = sbr.rel (%p209) target = $region16
        $region15: #{tpu_custom_call.1} parent=11 // pred_region
          _
        $region16: #{tpu_custom_call.1} parent=11 // pred_fallthru
          _
        // Predicated region
        $region17: #{tpu_custom_call.1} parent=11 // pred_check
          %p212 = pneg %p84
        $region18: #{tpu_custom_call.1} parent=11 // pred_check_branch
          %214 = sbr.rel (%p212) target = $region20
        $region19: #{tpu_custom_call.1} parent=11 // pred_region
          _
        $region20: #{tpu_custom_call.1} parent=11 // pred_fallthru
          _
        // Predicated region
        $region21: #{tpu_custom_call.1} parent=11 // pred_check
          %p215 = pneg %p105
        $region22: #{tpu_custom_call.1} parent=11 // pred_check_branch
          %217 = sbr.rel (%p215) target = $region24
        $region23: #{tpu_custom_call.1} parent=11 // pred_region
          _
        $region24: #{tpu_custom_call.1} parent=11 // pred_fallthru
          _
        // Predicated region
        $region25: #{tpu_custom_call.1} parent=11 // pred_check
          %p218 = pneg %p126
        $region26: #{tpu_custom_call.1} parent=11 // pred_check_branch
          %220 = sbr.rel (%p218) target = $region28
        $region27: #{tpu_custom_call.1} parent=11 // pred_region
          _
        $region28: #{tpu_custom_call.1} parent=11 // pred_fallthru
          _
        // Predicated region
        $region29: #{tpu_custom_call.1} parent=11 // pred_check
          %p221 = pneg %p147
        $region30: #{tpu_custom_call.1} parent=11 // pred_check_branch
          %223 = sbr.rel (%p221) target = $region32
        $region31: #{tpu_custom_call.1} parent=11 // pred_region
          _
        $region32: #{tpu_custom_call.1} parent=11 // pred_fallthru
          _
        // Predicated region
        $region33: #{tpu_custom_call.1} parent=11 // pred_check
          %p224 = pneg %p168
        $region34: #{tpu_custom_call.1} parent=11 // pred_check_branch
          %226 = sbr.rel (%p224) target = $region36
        $region35: #{tpu_custom_call.1} parent=11 // pred_region
          _
        $region36: #{tpu_custom_call.1} parent=11 // pred_fallthru
          _
      $region12: #{tpu_custom_call.1} parent=5 // pred_fallthru
        _
      %p227 = scmp.lt.s32.totalorder %s16, 2
      // Predicated region
      $region37: #{tpu_custom_call.1} parent=5 // pred_check
        %p228 = pneg %p227
      $region38: #{tpu_custom_call.1} parent=5 // pred_check_branch
        %230 = sbr.rel (%p228) target = $region40
      $region39: #{tpu_custom_call.1} parent=5 // pred_region
        // Predicated region
        $region41: #{tpu_custom_call.1} parent=39 // pred_check
          %p231 = pneg %p36
        $region42: #{tpu_custom_call.1} parent=39 // pred_check_branch
          %233 = sbr.rel (%p231) target = $region44
        $region43: #{tpu_custom_call.1} parent=39 // pred_region
          %s234 = smul.u32 4, %s16
          %p235 = scmp.lt.s32.totalorder %s234, 7
          %s236 = scalar_select %p235, %s234, 7
          %s237 = smul.addr %s236, 2
          %s238 = scalar_lea.vmem %s0, %s237
          %s239 = smul.u32 4, %s16
        $region44: #{tpu_custom_call.1} parent=39 // pred_fallthru
          _
      $region40: #{tpu_custom_call.1} parent=5 // pred_fallthru
        _
      %p240 = scmp.le.s32.totalorder 1, %s16
      %p241 = scmp.lt.s32.totalorder %s16, 3
      %p242 = pnand %p240, %p241
      %p243 = pneg %p242
      // Predicated region
      $region45: #{tpu_custom_call.1} parent=5 // pred_check
        _
      $region46: #{tpu_custom_call.1} parent=5 // pred_check_branch
        %245 = sbr.rel (%p242) target = $region48
      $region47: #{tpu_custom_call.1} parent=5 // pred_region
        %s246 = ssub.s32 %s16, 1
        %s247 = smul.u32 4, %s21
        %p248 = scmp.lt.s32.totalorder %s247, 7
        %s249 = scalar_select %p248, %s247, 7
        %s250 = smul.addr %s249, 2
        %s251 = scalar_lea.vmem %s0, %s250
        %p252 = pneg %p42
        %p253 = pneg %p39
        %p254 = pneg %p63
        %p255 = pneg %p60
        %p256 = pneg %p84
        %p257 = pneg %p81
        %p258 = pneg %p105
        %p259 = pneg %p102
        %p260 = pneg %p126
        %p261 = pneg %p123
        %p262 = pneg %p147
        %p263 = pneg %p144
        %p264 = pneg %p168
        %p265 = pneg %p165
        %p266 = pneg %p194
        %p267 = pneg %p191
        %s268 = sand.u32 %s181, 1
        %s269 = scalar_lea.sflag [#allocation3], %s268
        %s270 = sand.u32 %s181, 1
        %s271 = smul.addr %s270, 8
        %s272 = scalar_lea.vmem [#allocation2], %s271
        %s273 = smul.u32 4, %s21
        %p274 = scmp.lt.s32.totalorder %s273, 7
        %s275 = scalar_select %p274, %s273, 7
        %s276 = smul.addr %s275, 2
        %s277 = scalar_lea.vmem %s0, %s276
        %s278 = smul.u32 4, %s21
        %s279 = smul.u32 4, %s21
        %v280 = vld [vmem:[%s277] sm:$0xff]
        %v281 = vld [vmem:[%s1] sm:$0xff]
        %v282 = vld [vmem:[%s1 + $0x8] sm:$0xff]
        %v283 = vld [vmem:[%s1 + $0x10] sm:$0xff]
        %v284 = vld [vmem:[%s1 + $0x18] sm:$0xff]
        %v285 = vld [vmem:[%s1 + $0x20] sm:$0xff]
        %v286 = vld [vmem:[%s1 + $0x28] sm:$0xff]
        %v287 = vld [vmem:[%s1 + $0x30] sm:$0xff]
        %v288 = vld [vmem:[%s1 + $0x38] sm:$0xff]
        %290 = vset.pattern.permute.xlu0 0
        %291 = vperm.xlu0 %290, %v281
        %v292 = vpop.permute.xlu0 %291
        %295 = vset.pattern.permute.xlu0 0
        %296 = vperm.xlu0 %295, %v282
        %v297 = vpop.permute.xlu0 %296
        %300 = vset.pattern.permute.xlu0 0
        %301 = vperm.xlu0 %300, %v283
        %v302 = vpop.permute.xlu0 %301
        %305 = vset.pattern.permute.xlu0 0
        %306 = vperm.xlu0 %305, %v284
        %v307 = vpop.permute.xlu0 %306
        %310 = vset.pattern.permute.xlu0 0
        %311 = vperm.xlu0 %310, %v285
        %v312 = vpop.permute.xlu0 %311
        %315 = vset.pattern.permute.xlu0 0
        %316 = vperm.xlu0 %315, %v286
        %v317 = vpop.permute.xlu0 %316
        %320 = vset.pattern.permute.xlu0 0
        %321 = vperm.xlu0 %320, %v287
        %v322 = vpop.permute.xlu0 %321
        %325 = vset.pattern.permute.xlu0 0
        %326 = vperm.xlu0 %325, %v288
        %v327 = vpop.permute.xlu0 %326
        %v330 = vlaneseq
        %v331 = vshrl.u32 %v330, 7
        %v332 = vsub.s32 0, %v331
        %v333 = vrot.slane %v280, %v332
        %v334 = vlaneseq
        %v335 = vshrl.u32 %v334, 7
        %v336 = vsub.s32 2, %v335
        %v337 = vrot.slane %v280, %v336
        %v338 = vlaneseq
        %v339 = vshrl.u32 %v338, 7
        %v340 = vsub.s32 4, %v339
        %v341 = vrot.slane %v280, %v340
        %v342 = vlaneseq
        %v343 = vshrl.u32 %v342, 7
        %v344 = vsub.s32 6, %v343
        %v345 = vrot.slane %v280, %v344
        %v350 = vlaneseq
        %v351 = vshrl.u32 %v350, 7
        %v352 = vsub.s32 0, %v351
        %v353 = vrot.slane %v333, %v352
        %v354 = vlaneseq
        %v355 = vshrl.u32 %v354, 7
        %v356 = vsub.s32 0, %v355
        %v357 = vrot.slane %v337, %v356
        %v358 = vlaneseq
        %v359 = vshrl.u32 %v358, 7
        %v360 = vsub.s32 0, %v359
        %v361 = vrot.slane %v341, %v360
        %v362 = vlaneseq
        %v363 = vshrl.u32 %v362, 7
        %v364 = vsub.s32 0, %v363
        %v365 = vrot.slane %v345, %v364
        %v366 = vmul.f32 %v292, %v353
        %v367 = vmul.f32 %v292, %v357
        %v368 = vmul.f32 %v292, %v361
        %v369 = vmul.f32 %v292, %v365
        %v370 = vmul.f32 %v297, %v353
        %v371 = vmul.f32 %v297, %v357
        %v372 = vmul.f32 %v297, %v361
        %v373 = vmul.f32 %v297, %v365
        %v374 = vmul.f32 %v302, %v353
        %v375 = vmul.f32 %v302, %v357
        %v376 = vmul.f32 %v302, %v361
        %v377 = vmul.f32 %v302, %v365
        %v378 = vmul.f32 %v307, %v353
        %v379 = vmul.f32 %v307, %v357
        %v380 = vmul.f32 %v307, %v361
        %v381 = vmul.f32 %v307, %v365
        %v382 = vmul.f32 %v312, %v353
        %v383 = vmul.f32 %v312, %v357
        %v384 = vmul.f32 %v312, %v361
        %v385 = vmul.f32 %v312, %v365
        %v386 = vmul.f32 %v317, %v353
        %v387 = vmul.f32 %v317, %v357
        %v388 = vmul.f32 %v317, %v361
        %v389 = vmul.f32 %v317, %v365
        %v390 = vmul.f32 %v322, %v353
        %v391 = vmul.f32 %v322, %v357
        %v392 = vmul.f32 %v322, %v361
        %v393 = vmul.f32 %v322, %v365
        %v394 = vmul.f32 %v327, %v353
        %v395 = vmul.f32 %v327, %v357
        %v396 = vmul.f32 %v327, %v361
        %v397 = vmul.f32 %v327, %v365
        %398 = vset.pattern.permute.xlu0 1
        %399 = vperm.xlu0 %398, %v281
        %v400 = vpop.permute.xlu0 %399
        %402 = vset.pattern.permute.xlu0 1
        %403 = vperm.xlu0 %402, %v282
        %v404 = vpop.permute.xlu0 %403
        %406 = vset.pattern.permute.xlu0 1
        %407 = vperm.xlu0 %406, %v283
        %v408 = vpop.permute.xlu0 %407
        %410 = vset.pattern.permute.xlu0 1
        %411 = vperm.xlu0 %410, %v284
        %v412 = vpop.permute.xlu0 %411
        %414 = vset.pattern.permute.xlu0 1
        %415 = vperm.xlu0 %414, %v285
        %v416 = vpop.permute.xlu0 %415
        %418 = vset.pattern.permute.xlu0 1
        %419 = vperm.xlu0 %418, %v286
        %v420 = vpop.permute.xlu0 %419
        %422 = vset.pattern.permute.xlu0 1
        %423 = vperm.xlu0 %422, %v287
        %v424 = vpop.permute.xlu0 %423
        %426 = vset.pattern.permute.xlu0 1
        %427 = vperm.xlu0 %426, %v288
        %v428 = vpop.permute.xlu0 %427
        %v430 = vlaneseq
        %v431 = vshrl.u32 %v430, 7
        %v432 = vsub.s32 1, %v431
        %v433 = vrot.slane %v280, %v432
        %v434 = vlaneseq
        %v435 = vshrl.u32 %v434, 7
        %v436 = vsub.s32 3, %v435
        %v437 = vrot.slane %v280, %v436
        %v438 = vlaneseq
        %v439 = vshrl.u32 %v438, 7
        %v440 = vsub.s32 5, %v439
        %v441 = vrot.slane %v280, %v440
        %v442 = vlaneseq
        %v443 = vshrl.u32 %v442, 7
        %v444 = vsub.s32 7, %v443
        %v445 = vrot.slane %v280, %v444
        %v450 = vlaneseq
        %v451 = vshrl.u32 %v450, 7
        %v452 = vsub.s32 1, %v451
        %v453 = vrot.slane %v433, %v452
        %v454 = vlaneseq
        %v455 = vshrl.u32 %v454, 7
        %v456 = vsub.s32 1, %v455
        %v457 = vrot.slane %v437, %v456
        %v458 = vlaneseq
        %v459 = vshrl.u32 %v458, 7
        %v460 = vsub.s32 1, %v459
        %v461 = vrot.slane %v441, %v460
        %v462 = vlaneseq
        %v463 = vshrl.u32 %v462, 7
        %v464 = vsub.s32 1, %v463
        %v465 = vrot.slane %v445, %v464
        %v466 = vmul.f32 %v400, %v453
        %v467 = vmul.f32 %v400, %v457
        %v468 = vmul.f32 %v400, %v461
        %v469 = vmul.f32 %v400, %v465
        %v470 = vmul.f32 %v404, %v453
        %v471 = vmul.f32 %v404, %v457
        %v472 = vmul.f32 %v404, %v461
        %v473 = vmul.f32 %v404, %v465
        %v474 = vmul.f32 %v408, %v453
        %v475 = vmul.f32 %v408, %v457
        %v476 = vmul.f32 %v408, %v461
        %v477 = vmul.f32 %v408, %v465
        %v478 = vmul.f32 %v412, %v453
        %v479 = vmul.f32 %v412, %v457
        %v480 = vmul.f32 %v412, %v461
        %v481 = vmul.f32 %v412, %v465
        %v482 = vmul.f32 %v416, %v453
        %v483 = vmul.f32 %v416, %v457
        %v484 = vmul.f32 %v416, %v461
        %v485 = vmul.f32 %v416, %v465
        %v486 = vmul.f32 %v420, %v453
        %v487 = vmul.f32 %v420, %v457
        %v488 = vmul.f32 %v420, %v461
        %v489 = vmul.f32 %v420, %v465
        %v490 = vmul.f32 %v424, %v453
        %v491 = vmul.f32 %v424, %v457
        %v492 = vmul.f32 %v424, %v461
        %v493 = vmul.f32 %v424, %v465
        %v494 = vmul.f32 %v428, %v453
        %v495 = vmul.f32 %v428, %v457
        %v496 = vmul.f32 %v428, %v461
        %v497 = vmul.f32 %v428, %v465
        %v498 = vadd.f32 %v366, %v466
        %v499 = vadd.f32 %v367, %v467
        %v500 = vadd.f32 %v368, %v468
        %v501 = vadd.f32 %v369, %v469
        %v502 = vadd.f32 %v370, %v470
        %v503 = vadd.f32 %v371, %v471
        %v504 = vadd.f32 %v372, %v472
        %v505 = vadd.f32 %v373, %v473
        %v506 = vadd.f32 %v374, %v474
        %v507 = vadd.f32 %v375, %v475
        %v508 = vadd.f32 %v376, %v476
        %v509 = vadd.f32 %v377, %v477
        %v510 = vadd.f32 %v378, %v478
        %v511 = vadd.f32 %v379, %v479
        %v512 = vadd.f32 %v380, %v480
        %v513 = vadd.f32 %v381, %v481
        %v514 = vadd.f32 %v382, %v482
        %v515 = vadd.f32 %v383, %v483
        %v516 = vadd.f32 %v384, %v484
        %v517 = vadd.f32 %v385, %v485
        %v518 = vadd.f32 %v386, %v486
        %v519 = vadd.f32 %v387, %v487
        %v520 = vadd.f32 %v388, %v488
        %v521 = vadd.f32 %v389, %v489
        %v522 = vadd.f32 %v390, %v490
        %v523 = vadd.f32 %v391, %v491
        %v524 = vadd.f32 %v392, %v492
        %v525 = vadd.f32 %v393, %v493
        %v526 = vadd.f32 %v394, %v494
        %v527 = vadd.f32 %v395, %v495
        %v528 = vadd.f32 %v396, %v496
        %v529 = vadd.f32 %v397, %v497
        %v530 = vld [vmem:[%s2] sm:$0xff]
        %v531 = vld [vmem:[%s2 + $0x8] sm:$0xff]
        %v532 = vld [vmem:[%s2 + $0x10] sm:$0xff]
        %v533 = vld [vmem:[%s2 + $0x18] sm:$0xff]
        %v534 = vld [vmem:[%s2 + $0x20] sm:$0xff]
        %v535 = vld [vmem:[%s2 + $0x28] sm:$0xff]
        %v536 = vld [vmem:[%s2 + $0x30] sm:$0xff]
        %v537 = vld [vmem:[%s2 + $0x38] sm:$0xff]
        %539 = vset.pattern.permute.xlu0 0
        %540 = vperm.xlu0 %539, %v530
        %v541 = vpop.permute.xlu0 %540
        %544 = vset.pattern.permute.xlu0 0
        %545 = vperm.xlu0 %544, %v531
        %v546 = vpop.permute.xlu0 %545
        %549 = vset.pattern.permute.xlu0 0
        %550 = vperm.xlu0 %549, %v532
        %v551 = vpop.permute.xlu0 %550
        %554 = vset.pattern.permute.xlu0 0
        %555 = vperm.xlu0 %554, %v533
        %v556 = vpop.permute.xlu0 %555
        %559 = vset.pattern.permute.xlu0 0
        %560 = vperm.xlu0 %559, %v534
        %v561 = vpop.permute.xlu0 %560
        %564 = vset.pattern.permute.xlu0 0
        %565 = vperm.xlu0 %564, %v535
        %v566 = vpop.permute.xlu0 %565
        %569 = vset.pattern.permute.xlu0 0
        %570 = vperm.xlu0 %569, %v536
        %v571 = vpop.permute.xlu0 %570
        %574 = vset.pattern.permute.xlu0 0
        %575 = vperm.xlu0 %574, %v537
        %v576 = vpop.permute.xlu0 %575
        %v578 = vadd.f32 %v498, %v541
        %v579 = vadd.f32 %v499, %v541
        %v580 = vadd.f32 %v500, %v541
        %v581 = vadd.f32 %v501, %v541
        %v582 = vadd.f32 %v502, %v546
        %v583 = vadd.f32 %v503, %v546
        %v584 = vadd.f32 %v504, %v546
        %v585 = vadd.f32 %v505, %v546
        %v586 = vadd.f32 %v506, %v551
        %v587 = vadd.f32 %v507, %v551
        %v588 = vadd.f32 %v508, %v551
        %v589 = vadd.f32 %v509, %v551
        %v590 = vadd.f32 %v510, %v556
        %v591 = vadd.f32 %v511, %v556
        %v592 = vadd.f32 %v512, %v556
        %v593 = vadd.f32 %v513, %v556
        %v594 = vadd.f32 %v514, %v561
        %v595 = vadd.f32 %v515, %v561
        %v596 = vadd.f32 %v516, %v561
        %v597 = vadd.f32 %v517, %v561
        %v598 = vadd.f32 %v518, %v566
        %v599 = vadd.f32 %v519, %v566
        %v600 = vadd.f32 %v520, %v566
        %v601 = vadd.f32 %v521, %v566
        %v602 = vadd.f32 %v522, %v571
        %v603 = vadd.f32 %v523, %v571
        %v604 = vadd.f32 %v524, %v571
        %v605 = vadd.f32 %v525, %v571
        %v606 = vadd.f32 %v526, %v576
        %v607 = vadd.f32 %v527, %v576
        %v608 = vadd.f32 %v528, %v576
        %v609 = vadd.f32 %v529, %v576
        %v610 = vmax.f32 %v578, 0.0
        %v611 = vmax.f32 %v579, 0.0
        %v612 = vmax.f32 %v580, 0.0
        %v613 = vmax.f32 %v581, 0.0
        %v614 = vmax.f32 %v582, 0.0
        %v615 = vmax.f32 %v583, 0.0
        %v616 = vmax.f32 %v584, 0.0
        %v617 = vmax.f32 %v585, 0.0
        %v618 = vmax.f32 %v586, 0.0
        %v619 = vmax.f32 %v587, 0.0
        %v620 = vmax.f32 %v588, 0.0
        %v621 = vmax.f32 %v589, 0.0
        %v622 = vmax.f32 %v590, 0.0
        %v623 = vmax.f32 %v591, 0.0
        %v624 = vmax.f32 %v592, 0.0
        %v625 = vmax.f32 %v593, 0.0
        %v626 = vmax.f32 %v594, 0.0
        %v627 = vmax.f32 %v595, 0.0
        %v628 = vmax.f32 %v596, 0.0
        %v629 = vmax.f32 %v597, 0.0
        %v630 = vmax.f32 %v598, 0.0
        %v631 = vmax.f32 %v599, 0.0
        %v632 = vmax.f32 %v600, 0.0
        %v633 = vmax.f32 %v601, 0.0
        %v634 = vmax.f32 %v602, 0.0
        %v635 = vmax.f32 %v603, 0.0
        %v636 = vmax.f32 %v604, 0.0
        %v637 = vmax.f32 %v605, 0.0
        %v638 = vmax.f32 %v606, 0.0
        %v639 = vmax.f32 %v607, 0.0
        %v640 = vmax.f32 %v608, 0.0
        %v641 = vmax.f32 %v609, 0.0
        %v642 = vld [vmem:[%s3] sm:$0xff]
        %v643 = vld [vmem:[%s3 + $0x8] sm:$0xff]
        %v644 = vld [vmem:[%s3 + $0x10] sm:$0xff]
        %v645 = vld [vmem:[%s3 + $0x18] sm:$0xff]
        %v646 = vld [vmem:[%s3 + $0x20] sm:$0xff]
        %v647 = vld [vmem:[%s3 + $0x28] sm:$0xff]
        %v648 = vld [vmem:[%s3 + $0x30] sm:$0xff]
        %v649 = vld [vmem:[%s3 + $0x38] sm:$0xff]
        %v650 = vld [vmem:[%s4] sm:$0xff]
        %v651 = vld [vmem:[%s4 + $0x8] sm:$0xff]
        %v652 = vld [vmem:[%s4 + $0x10] sm:$0xff]
        %v653 = vld [vmem:[%s4 + $0x18] sm:$0xff]
        %v654 = vld [vmem:[%s4 + $0x20] sm:$0xff]
        %v655 = vld [vmem:[%s4 + $0x28] sm:$0xff]
        %v656 = vld [vmem:[%s4 + $0x30] sm:$0xff]
        %v657 = vld [vmem:[%s4 + $0x38] sm:$0xff]
        %659 = vset.pattern.permute.xlu0 0
        %660 = vperm.xlu0 %659, %v650
        %v661 = vpop.permute.xlu0 %660
        %664 = vset.pattern.permute.xlu0 0
        %665 = vperm.xlu0 %664, %v651
        %v666 = vpop.permute.xlu0 %665
        %669 = vset.pattern.permute.xlu0 0
        %670 = vperm.xlu0 %669, %v652
        %v671 = vpop.permute.xlu0 %670
        %674 = vset.pattern.permute.xlu0 0
        %675 = vperm.xlu0 %674, %v653
        %v676 = vpop.permute.xlu0 %675
        %679 = vset.pattern.permute.xlu0 0
        %680 = vperm.xlu0 %679, %v654
        %v681 = vpop.permute.xlu0 %680
        %684 = vset.pattern.permute.xlu0 0
        %685 = vperm.xlu0 %684, %v655
        %v686 = vpop.permute.xlu0 %685
        %689 = vset.pattern.permute.xlu0 0
        %690 = vperm.xlu0 %689, %v656
        %v691 = vpop.permute.xlu0 %690
        %694 = vset.pattern.permute.xlu0 0
        %695 = vperm.xlu0 %694, %v657
        %v696 = vpop.permute.xlu0 %695
        %vm698 = vcmask 523264
        %v700 = vsel %vm698, %v642, 0
        %v703 = vsel %vm698, %v643, 0
        %v706 = vsel %vm698, %v644, 0
        %v709 = vsel %vm698, %v645, 0
        %v712 = vsel %vm698, %v646, 0
        %v715 = vsel %vm698, %v647, 0
        %v718 = vsel %vm698, %v648, 0
        %v721 = vsel %vm698, %v649, 0
        %723 = vmatprep.subr.mxu0 0.0
        %724 = vmatpush1.msra.mxu0 0.0
        %725 = vmatprep.subr.mxu0 0.0
        %726 = vmatpush1.msra.mxu0 0.0
        %727 = vmatprep.subr.mxu0 0.0
        %728 = vmatpush1.msra.mxu0 0.0
        %729 = vmatprep.subr.mxu0 0.0
        %730 = vmatpush1.msra.mxu0 0.0
        %731 = vmatprep.subr.mxu0 0.0
        %732 = vmatpush1.msra.mxu0 0.0
        %733 = vmatprep.subr.mxu0 0.0
        %734 = vmatpush1.msra.mxu0 0.0
        %735 = vmatprep.subr.mxu0 0.0
        %736 = vmatpush1.msra.mxu0 0.0
        %737 = vmatprep.subr.mxu0 0.0
        %738 = vmatpush1.msra.mxu0 0.0
        %739 = vmatprep.subr.mxu0 %v639
        %740 = vmatpush1.msra.mxu0 %v638
        %741 = vmatprep.subr.mxu0 %v635
        %742 = vmatpush1.msra.mxu0 %v634
        %743 = vmatprep.subr.mxu0 %v631
        %744 = vmatpush1.msra.mxu0 %v630
        %745 = vmatprep.subr.mxu0 %v627
        %746 = vmatpush1.msra.mxu0 %v626
        %747 = vmatprep.subr.mxu0 %v623
        %748 = vmatpush1.msra.mxu0 %v622
        %749 = vmatprep.subr.mxu0 %v619
        %750 = vmatpush1.msra.mxu0 %v618
        %751 = vmatprep.subr.mxu0 %v615
        %752 = vmatpush1.msra.mxu0 %v614
        %753 = vmatprep.subr.mxu0 %v611
        %754 = vmatpush1.msra.mxu0 %v610
        %755 = vmatprep.subr.mxu0 0.0
        %756 = vmatpush2.msra.mxu0 0.0
        %757 = vmatprep.subr.mxu0 0.0
        %758 = vmatpush2.msra.mxu0 0.0
        %759 = vmatprep.subr.mxu0 0.0
        %760 = vmatpush2.msra.mxu0 0.0
        %761 = vmatprep.subr.mxu0 0.0
        %762 = vmatpush2.msra.mxu0 0.0
        %763 = vmatprep.subr.mxu0 0.0
        %764 = vmatpush2.msra.mxu0 0.0
        %765 = vmatprep.subr.mxu0 0.0
        %766 = vmatpush2.msra.mxu0 0.0
        %767 = vmatprep.subr.mxu0 0.0
        %768 = vmatpush2.msra.mxu0 0.0
        %769 = vmatprep.subr.mxu0 0.0
        %770 = vmatpush2.msra.mxu0 0.0
        %771 = vmatprep.subr.mxu0 0.0
        %772 = vmatpush2.msra.mxu0 0.0
        %773 = vmatprep.subr.mxu0 0.0
        %774 = vmatpush2.msra.mxu0 0.0
        %775 = vmatprep.subr.mxu0 0.0
        %776 = vmatpush2.msra.mxu0 0.0
        %777 = vmatprep.subr.mxu0 0.0
        %778 = vmatpush2.msra.mxu0 0.0
        %779 = vmatprep.subr.mxu0 0.0
        %780 = vmatpush2.msra.mxu0 0.0
        %781 = vmatprep.subr.mxu0 0.0
        %782 = vmatpush2.msra.mxu0 0.0
        %783 = vmatprep.subr.mxu0 0.0
        %784 = vmatpush2.msra.mxu0 0.0
        %785 = vmatprep.subr.mxu0 0.0
        %786 = vmatpush2.msra.mxu0 0.0
        %787 = vmatprep.mubr.f32.mxu0 0.0
        %788 = vmatmul.mubr.f32.gmra.mxu0 %v700
        %v789 = vpop.f32.mrf.mxu0
        %v790 = vadd.f32 %v661, %v789
        %v791 = vpop.f32.mrf.mxu0
        %v792 = vadd.f32 %v661, %v791
        %793 = vmatprep.mubr.f32.mxu0 0.0
        %794 = vmatmul.mubr.f32.gmra.mxu0 %v703
        %v795 = vpop.f32.mrf.mxu0
        %v796 = vadd.f32 %v666, %v795
        %v797 = vpop.f32.mrf.mxu0
        %v798 = vadd.f32 %v666, %v797
        %799 = vmatprep.mubr.f32.mxu0 0.0
        %800 = vmatmul.mubr.f32.gmra.mxu0 %v706
        %v801 = vpop.f32.mrf.mxu0
        %v802 = vadd.f32 %v671, %v801
        %v803 = vpop.f32.mrf.mxu0
        %v804 = vadd.f32 %v671, %v803
        %805 = vmatprep.mubr.f32.mxu0 0.0
        %806 = vmatmul.mubr.f32.gmra.mxu0 %v709
        %v807 = vpop.f32.mrf.mxu0
        %v808 = vadd.f32 %v676, %v807
        %v809 = vpop.f32.mrf.mxu0
        %v810 = vadd.f32 %v676, %v809
        %811 = vmatprep.mubr.f32.mxu0 0.0
        %812 = vmatmul.mubr.f32.gmra.mxu0 %v712
        %v813 = vpop.f32.mrf.mxu0
        %v814 = vadd.f32 %v681, %v813
        %v815 = vpop.f32.mrf.mxu0
        %v816 = vadd.f32 %v681, %v815
        %817 = vmatprep.mubr.f32.mxu0 0.0
        %818 = vmatmul.mubr.f32.gmra.mxu0 %v715
        %v819 = vpop.f32.mrf.mxu0
        %v820 = vadd.f32 %v686, %v819
        %v821 = vpop.f32.mrf.mxu0
        %v822 = vadd.f32 %v686, %v821
        %823 = vmatprep.mubr.f32.mxu0 0.0
        %824 = vmatmul.mubr.f32.gmra.mxu0 %v718
        %v825 = vpop.f32.mrf.mxu0
        %v826 = vadd.f32 %v691, %v825
        %v827 = vpop.f32.mrf.mxu0
        %v828 = vadd.f32 %v691, %v827
        %829 = vmatprep.mubr.f32.mxu0 0.0
        %830 = vmatmul.mubr.f32.gmra.mxu0 %v721
        %v831 = vpop.f32.mrf.mxu0
        %v832 = vadd.f32 %v696, %v831
        %v833 = vpop.f32.mrf.mxu0
        %v834 = vadd.f32 %v696, %v833
        %835 = vdwg.mxu0
        %836 = vmatprep.subr.mxu0 0.0
        %837 = vmatpush1.msra.mxu0 0.0
        %838 = vmatprep.subr.mxu0 0.0
        %839 = vmatpush1.msra.mxu0 0.0
        %840 = vmatprep.subr.mxu0 0.0
        %841 = vmatpush1.msra.mxu0 0.0
        %842 = vmatprep.subr.mxu0 0.0
        %843 = vmatpush1.msra.mxu0 0.0
        %844 = vmatprep.subr.mxu0 0.0
        %845 = vmatpush1.msra.mxu0 0.0
        %846 = vmatprep.subr.mxu0 0.0
        %847 = vmatpush1.msra.mxu0 0.0
        %848 = vmatprep.subr.mxu0 0.0
        %849 = vmatpush1.msra.mxu0 0.0
        %850 = vmatprep.subr.mxu0 0.0
        %851 = vmatpush1.msra.mxu0 0.0
        %852 = vmatprep.subr.mxu0 %v641
        %853 = vmatpush1.msra.mxu0 %v640
        %854 = vmatprep.subr.mxu0 %v637
        %855 = vmatpush1.msra.mxu0 %v636
        %856 = vmatprep.subr.mxu0 %v633
        %857 = vmatpush1.msra.mxu0 %v632
        %858 = vmatprep.subr.mxu0 %v629
        %859 = vmatpush1.msra.mxu0 %v628
        %860 = vmatprep.subr.mxu0 %v625
        %861 = vmatpush1.msra.mxu0 %v624
        %862 = vmatprep.subr.mxu0 %v621
        %863 = vmatpush1.msra.mxu0 %v620
        %864 = vmatprep.subr.mxu0 %v617
        %865 = vmatpush1.msra.mxu0 %v616
        %866 = vmatprep.subr.mxu0 %v613
        %867 = vmatpush1.msra.mxu0 %v612
        %868 = vmatprep.subr.mxu0 0.0
        %869 = vmatpush2.msra.mxu0 0.0
        %870 = vmatprep.subr.mxu0 0.0
        %871 = vmatpush2.msra.mxu0 0.0
        %872 = vmatprep.subr.mxu0 0.0
        %873 = vmatpush2.msra.mxu0 0.0
        %874 = vmatprep.subr.mxu0 0.0
        %875 = vmatpush2.msra.mxu0 0.0
        %876 = vmatprep.subr.mxu0 0.0
        %877 = vmatpush2.msra.mxu0 0.0
        %878 = vmatprep.subr.mxu0 0.0
        %879 = vmatpush2.msra.mxu0 0.0
        %880 = vmatprep.subr.mxu0 0.0
        %881 = vmatpush2.msra.mxu0 0.0
        %882 = vmatprep.subr.mxu0 0.0
        %883 = vmatpush2.msra.mxu0 0.0
        %884 = vmatprep.subr.mxu0 0.0
        %885 = vmatpush2.msra.mxu0 0.0
        %886 = vmatprep.subr.mxu0 0.0
        %887 = vmatpush2.msra.mxu0 0.0
        %888 = vmatprep.subr.mxu0 0.0
        %889 = vmatpush2.msra.mxu0 0.0
        %890 = vmatprep.subr.mxu0 0.0
        %891 = vmatpush2.msra.mxu0 0.0
        %892 = vmatprep.subr.mxu0 0.0
        %893 = vmatpush2.msra.mxu0 0.0
        %894 = vmatprep.subr.mxu0 0.0
        %895 = vmatpush2.msra.mxu0 0.0
        %896 = vmatprep.subr.mxu0 0.0
        %897 = vmatpush2.msra.mxu0 0.0
        %898 = vmatprep.subr.mxu0 0.0
        %899 = vmatpush2.msra.mxu0 0.0
        %900 = vmatprep.mubr.f32.mxu0 0.0
        %901 = vmatmul.mubr.f32.gmra.mxu0 %v700
        %v902 = vpop.f32.mrf.mxu0
        %v903 = vadd.f32 %v661, %v902
        %v904 = vpop.f32.mrf.mxu0
        %v905 = vadd.f32 %v661, %v904
        %906 = vmatprep.mubr.f32.mxu0 0.0
        %907 = vmatmul.mubr.f32.gmra.mxu0 %v703
        %v908 = vpop.f32.mrf.mxu0
        %v909 = vadd.f32 %v666, %v908
        %v910 = vpop.f32.mrf.mxu0
        %v911 = vadd.f32 %v666, %v910
        %912 = vmatprep.mubr.f32.mxu0 0.0
        %913 = vmatmul.mubr.f32.gmra.mxu0 %v706
        %v914 = vpop.f32.mrf.mxu0
        %v915 = vadd.f32 %v671, %v914
        %v916 = vpop.f32.mrf.mxu0
        %v917 = vadd.f32 %v671, %v916
        %918 = vmatprep.mubr.f32.mxu0 0.0
        %919 = vmatmul.mubr.f32.gmra.mxu0 %v709
        %v920 = vpop.f32.mrf.mxu0
        %v921 = vadd.f32 %v676, %v920
        %v922 = vpop.f32.mrf.mxu0
        %v923 = vadd.f32 %v676, %v922
        %924 = vmatprep.mubr.f32.mxu0 0.0
        %925 = vmatmul.mubr.f32.gmra.mxu0 %v712
        %v926 = vpop.f32.mrf.mxu0
        %v927 = vadd.f32 %v681, %v926
        %v928 = vpop.f32.mrf.mxu0
        %v929 = vadd.f32 %v681, %v928
        %930 = vmatprep.mubr.f32.mxu0 0.0
        %931 = vmatmul.mubr.f32.gmra.mxu0 %v715
        %v932 = vpop.f32.mrf.mxu0
        %v933 = vadd.f32 %v686, %v932
        %v934 = vpop.f32.mrf.mxu0
        %v935 = vadd.f32 %v686, %v934
        %936 = vmatprep.mubr.f32.mxu0 0.0
        %937 = vmatmul.mubr.f32.gmra.mxu0 %v718
        %v938 = vpop.f32.mrf.mxu0
        %v939 = vadd.f32 %v691, %v938
        %v940 = vpop.f32.mrf.mxu0
        %v941 = vadd.f32 %v691, %v940
        %942 = vmatprep.mubr.f32.mxu0 0.0
        %943 = vmatmul.mubr.f32.gmra.mxu0 %v721
        %v944 = vpop.f32.mrf.mxu0
        %v945 = vadd.f32 %v696, %v944
        %v946 = vpop.f32.mrf.mxu0
        %v947 = vadd.f32 %v696, %v946
        %948 = vdwg.mxu0
        %v949 = vmax.f32 %v790, 0.0
        %v950 = vmax.f32 %v792, 0.0
        %v951 = vmax.f32 %v903, 0.0
        %v952 = vmax.f32 %v905, 0.0
        %v953 = vmax.f32 %v796, 0.0
        %v954 = vmax.f32 %v798, 0.0
        %v955 = vmax.f32 %v909, 0.0
        %v956 = vmax.f32 %v911, 0.0
        %v957 = vmax.f32 %v802, 0.0
        %v958 = vmax.f32 %v804, 0.0
        %v959 = vmax.f32 %v915, 0.0
        %v960 = vmax.f32 %v917, 0.0
        %v961 = vmax.f32 %v808, 0.0
        %v962 = vmax.f32 %v810, 0.0
        %v963 = vmax.f32 %v921, 0.0
        %v964 = vmax.f32 %v923, 0.0
        %v965 = vmax.f32 %v814, 0.0
        %v966 = vmax.f32 %v816, 0.0
        %v967 = vmax.f32 %v927, 0.0
        %v968 = vmax.f32 %v929, 0.0
        %v969 = vmax.f32 %v820, 0.0
        %v970 = vmax.f32 %v822, 0.0
        %v971 = vmax.f32 %v933, 0.0
        %v972 = vmax.f32 %v935, 0.0
        %v973 = vmax.f32 %v826, 0.0
        %v974 = vmax.f32 %v828, 0.0
        %v975 = vmax.f32 %v939, 0.0
        %v976 = vmax.f32 %v941, 0.0
        %v977 = vmax.f32 %v832, 0.0
        %v978 = vmax.f32 %v834, 0.0
        %v979 = vmax.f32 %v945, 0.0
        %v980 = vmax.f32 %v947, 0.0
        %v981 = vld [vmem:[%s5] sm:$0x3]
        %v982 = vld [vmem:[%s6] sm:$0x3]
        %984 = vset.pattern.permute.xlu0 0
        %985 = vperm.xlu0 %984, %v982
        %v986 = vpop.permute.xlu0 %985
        %v989 = vsel %vm698, %v981, 0
        %991 = vmatprep.subr.mxu0 0.0
        %992 = vmatpush1.msra.mxu0 0.0
        %993 = vmatprep.subr.mxu0 0.0
        %994 = vmatpush1.msra.mxu0 0.0
        %995 = vmatprep.subr.mxu0 0.0
        %996 = vmatpush1.msra.mxu0 0.0
        %997 = vmatprep.subr.mxu0 0.0
        %998 = vmatpush1.msra.mxu0 0.0
        %999 = vmatprep.subr.mxu0 0.0
        %1000 = vmatpush1.msra.mxu0 0.0
        %1001 = vmatprep.subr.mxu0 0.0
        %1002 = vmatpush1.msra.mxu0 0.0
        %1003 = vmatprep.subr.mxu0 0.0
        %1004 = vmatpush1.msra.mxu0 0.0
        %1005 = vmatprep.subr.mxu0 0.0
        %1006 = vmatpush1.msra.mxu0 0.0
        %1007 = vmatprep.subr.mxu0 %v978
        %1008 = vmatpush1.msra.mxu0 %v977
        %1009 = vmatprep.subr.mxu0 %v974
        %1010 = vmatpush1.msra.mxu0 %v973
        %1011 = vmatprep.subr.mxu0 %v970
        %1012 = vmatpush1.msra.mxu0 %v969
        %1013 = vmatprep.subr.mxu0 %v966
        %1014 = vmatpush1.msra.mxu0 %v965
        %1015 = vmatprep.subr.mxu0 %v962
        %1016 = vmatpush1.msra.mxu0 %v961
        %1017 = vmatprep.subr.mxu0 %v958
        %1018 = vmatpush1.msra.mxu0 %v957
        %1019 = vmatprep.subr.mxu0 %v954
        %1020 = vmatpush1.msra.mxu0 %v953
        %1021 = vmatprep.subr.mxu0 %v950
        %1022 = vmatpush1.msra.mxu0 %v949
        %1023 = vmatprep.subr.mxu0 0.0
        %1024 = vmatpush2.msra.mxu0 0.0
        %1025 = vmatprep.subr.mxu0 0.0
        %1026 = vmatpush2.msra.mxu0 0.0
        %1027 = vmatprep.subr.mxu0 0.0
        %1028 = vmatpush2.msra.mxu0 0.0
        %1029 = vmatprep.subr.mxu0 0.0
        %1030 = vmatpush2.msra.mxu0 0.0
        %1031 = vmatprep.subr.mxu0 0.0
        %1032 = vmatpush2.msra.mxu0 0.0
        %1033 = vmatprep.subr.mxu0 0.0
        %1034 = vmatpush2.msra.mxu0 0.0
        %1035 = vmatprep.subr.mxu0 0.0
        %1036 = vmatpush2.msra.mxu0 0.0
        %1037 = vmatprep.subr.mxu0 0.0
        %1038 = vmatpush2.msra.mxu0 0.0
        %1039 = vmatprep.subr.mxu0 0.0
        %1040 = vmatpush2.msra.mxu0 0.0
        %1041 = vmatprep.subr.mxu0 0.0
        %1042 = vmatpush2.msra.mxu0 0.0
        %1043 = vmatprep.subr.mxu0 0.0
        %1044 = vmatpush2.msra.mxu0 0.0
        %1045 = vmatprep.subr.mxu0 0.0
        %1046 = vmatpush2.msra.mxu0 0.0
        %1047 = vmatprep.subr.mxu0 0.0
        %1048 = vmatpush2.msra.mxu0 0.0
        %1049 = vmatprep.subr.mxu0 0.0
        %1050 = vmatpush2.msra.mxu0 0.0
        %1051 = vmatprep.subr.mxu0 0.0
        %1052 = vmatpush2.msra.mxu0 0.0
        %1053 = vmatprep.subr.mxu0 0.0
        %1054 = vmatpush2.msra.mxu0 0.0
        %1055 = vmatprep.mubr.f32.mxu0 0.0
        %1056 = vmatmul.mubr.f32.gmra.mxu0 %v989
        %v1057 = vpop.f32.mrf.mxu0
        %v1058 = vadd.f32 %v986, %v1057
        %v1059 = vpop.f32.mrf.mxu0
        %v1060 = vadd.f32 %v986, %v1059
        %1061 = vdwg.mxu0
        %1062 = vmatprep.subr.mxu0 0.0
        %1063 = vmatpush1.msra.mxu0 0.0
        %1064 = vmatprep.subr.mxu0 0.0
        %1065 = vmatpush1.msra.mxu0 0.0
        %1066 = vmatprep.subr.mxu0 0.0
        %1067 = vmatpush1.msra.mxu0 0.0
        %1068 = vmatprep.subr.mxu0 0.0
        %1069 = vmatpush1.msra.mxu0 0.0
        %1070 = vmatprep.subr.mxu0 0.0
        %1071 = vmatpush1.msra.mxu0 0.0
        %1072 = vmatprep.subr.mxu0 0.0
        %1073 = vmatpush1.msra.mxu0 0.0
        %1074 = vmatprep.subr.mxu0 0.0
        %1075 = vmatpush1.msra.mxu0 0.0
        %1076 = vmatprep.subr.mxu0 0.0
        %1077 = vmatpush1.msra.mxu0 0.0
        %1078 = vmatprep.subr.mxu0 %v980
        %1079 = vmatpush1.msra.mxu0 %v979
        %1080 = vmatprep.subr.mxu0 %v976
        %1081 = vmatpush1.msra.mxu0 %v975
        %1082 = vmatprep.subr.mxu0 %v972
        %1083 = vmatpush1.msra.mxu0 %v971
        %1084 = vmatprep.subr.mxu0 %v968
        %1085 = vmatpush1.msra.mxu0 %v967
        %1086 = vmatprep.subr.mxu0 %v964
        %1087 = vmatpush1.msra.mxu0 %v963
        %1088 = vmatprep.subr.mxu0 %v960
        %1089 = vmatpush1.msra.mxu0 %v959
        %1090 = vmatprep.subr.mxu0 %v956
        %1091 = vmatpush1.msra.mxu0 %v955
        %1092 = vmatprep.subr.mxu0 %v952
        %1093 = vmatpush1.msra.mxu0 %v951
        %1094 = vmatprep.subr.mxu0 0.0
        %1095 = vmatpush2.msra.mxu0 0.0
        %1096 = vmatprep.subr.mxu0 0.0
        %1097 = vmatpush2.msra.mxu0 0.0
        %1098 = vmatprep.subr.mxu0 0.0
        %1099 = vmatpush2.msra.mxu0 0.0
        %1100 = vmatprep.subr.mxu0 0.0
        %1101 = vmatpush2.msra.mxu0 0.0
        %1102 = vmatprep.subr.mxu0 0.0
        %1103 = vmatpush2.msra.mxu0 0.0
        %1104 = vmatprep.subr.mxu0 0.0
        %1105 = vmatpush2.msra.mxu0 0.0
        %1106 = vmatprep.subr.mxu0 0.0
        %1107 = vmatpush2.msra.mxu0 0.0
        %1108 = vmatprep.subr.mxu0 0.0
        %1109 = vmatpush2.msra.mxu0 0.0
        %1110 = vmatprep.subr.mxu0 0.0
        %1111 = vmatpush2.msra.mxu0 0.0
        %1112 = vmatprep.subr.mxu0 0.0
        %1113 = vmatpush2.msra.mxu0 0.0
        %1114 = vmatprep.subr.mxu0 0.0
        %1115 = vmatpush2.msra.mxu0 0.0
        %1116 = vmatprep.subr.mxu0 0.0
        %1117 = vmatpush2.msra.mxu0 0.0
        %1118 = vmatprep.subr.mxu0 0.0
        %1119 = vmatpush2.msra.mxu0 0.0
        %1120 = vmatprep.subr.mxu0 0.0
        %1121 = vmatpush2.msra.mxu0 0.0
        %1122 = vmatprep.subr.mxu0 0.0
        %1123 = vmatpush2.msra.mxu0 0.0
        %1124 = vmatprep.subr.mxu0 0.0
        %1125 = vmatpush2.msra.mxu0 0.0
        %1126 = vmatprep.mubr.f32.mxu0 0.0
        %1127 = vmatmul.mubr.f32.gmra.mxu0 %v989
        %v1128 = vpop.f32.mrf.mxu0
        %v1129 = vadd.f32 %v986, %v1128
        %v1130 = vpop.f32.mrf.mxu0
        %v1131 = vadd.f32 %v986, %v1130
        %1132 = vdwg.mxu0
        %v1137 = vcombine.low %v1058, %v1060
        %v1138 = vcombine.low %v1129, %v1131
        %v1140 = vunpack.c.l.s4 1983009808
        %v1141 = vunpack.c.0.s8 %v1140
        %v1142 = vlaneseq
        %v1143 = vshrl.u32 %v1142, 7
        %v1144 = vsub.s32 %v1141, %v1143
        %v1145 = vrot.slane %v1137, %v1144
        %v1147 = vunpack.c.l.s4 1983009808
        %v1148 = vunpack.c.0.s8 %v1147
        %v1149 = vlaneseq
        %v1150 = vshrl.u32 %v1149, 7
        %v1151 = vsub.s32 %v1148, %v1150
        %v1152 = vrot.slane %v1138, %v1151
        %v1153 = vcombine.low %v1145, %v1152
        %1155 = vst [vmem:[%s272] sm:$0xff] %v1153
        %s1156 = sand.u32 %s181, 1
        %s1157 = scalar_lea.sflag [#allocation3], %s1156
        %s1158 = sand.u32 %s181, 1
        %s1159 = smul.addr %s1158, 8
        %s1160 = scalar_lea.vmem [#allocation2], %s1159
        // Predicated region
        $region49: #{tpu_custom_call.1} parent=47 // pred_check
          %p1161 = pneg %p191
        $region50: #{tpu_custom_call.1} parent=47 // pred_check_branch
          %1163 = sbr.rel (%p1161) target = $region52
        $region51: #{tpu_custom_call.1} parent=47 // pred_region
          %s1164 = smul.u32 4, %s21
          %s1166 = ssub.s32 128, 128
          %1167 = vsyncadd %s1157, %s1166
          %s1168 = smul.addr %s1164, 32
          %s1169 = scalar_lea.hbm %s7, %s1168
          %s1171 = sshll.u32 %s1160, 4
          %s1172 = int_to_ptr.vmem [resolvable:$true] %s1171
          %1174 = dma.vmem_to_hbm [thread:$0]  %s1172, 128, %s1169, %s1157
        $region52: #{tpu_custom_call.1} parent=47 // pred_fallthru
          _
      $region48: #{tpu_custom_call.1} parent=5 // pred_fallthru
        _
      %p1175 = scmp.le.s32.totalorder 2, %s16
      // Predicated region
      $region53: #{tpu_custom_call.1} parent=5 // pred_check
        %p1176 = pneg %p1175
      $region54: #{tpu_custom_call.1} parent=5 // pred_check_branch
        %1178 = sbr.rel (%p1176) target = $region56
      $region55: #{tpu_custom_call.1} parent=5 // pred_region
        %s1179 = ssub.s32 %s16, 2
        // Predicated region
        $region57: #{tpu_custom_call.1} parent=55 // pred_check
          %p1180 = pneg %p197
        $region58: #{tpu_custom_call.1} parent=55 // pred_check_branch
          %1182 = sbr.rel (%p1180) target = $region60
        $region59: #{tpu_custom_call.1} parent=55 // pred_region
          %s1183 = sand.u32 %s182, 1
          %s1184 = scalar_lea.sflag [#allocation3], %s1183
          %s1185 = sand.u32 %s182, 1
          %s1186 = smul.addr %s1185, 8
          %s1187 = scalar_lea.vmem [#allocation2], %s1186
          %1188 = dma.done %s1184, 128
        $region60: #{tpu_custom_call.1} parent=55 // pred_fallthru
          _
      $region56: #{tpu_custom_call.1} parent=5 // pred_fallthru
        _
    $region6: #{tpu_custom_call.1} parent=1 // loop_footer
      %s20 = sadd.s32 1, %s16
    $region7: #{tpu_custom_call.1} parent=1 // loop_footer_branch
      %15 = sbr.rel target = $region3
    $region8: #{tpu_custom_call.1} parent=1 // loop_exit
      _
    %1189 = vsyncpa [#allocation3], 1
    %s1190 = scalar_lea.sflag [#allocation3], 1
    %1191 = vsyncpa %s1190, 1

</llo_original>
